<compile_context>
chip_gen: v7x
topology: tpu7x:2x2x1
jax: 0.10.0
libtpu: 0.0.40
codegen_flags: <defaults>
</compile_context>

<pallas_src>
import functools
import math

import jax
import jax.numpy as jnp
from jax import lax
from jax.experimental import pallas as pl
from jax.experimental.pallas import tpu as pltpu


def _round_up(x, m):
    return (x + m - 1) // m * m


def _sublane(itemsize):
    # Sublane tile height per dtype width (f32: 8, bf16: 16, int8/fp8: 32).
    return {2: 16, 1: 32}.get(itemsize, 8)


def _vmem_capacity_bytes():
    """Physical VMEM per TensorCore (generation-aware), with a safe default."""
    try:
        info = pltpu.get_tpu_info()
        cap = getattr(info, "vmem_capacity_bytes", None)
        if cap:
            return int(cap)
    except Exception:
        pass
    return 64 << 20   # conservative: v7x per-TC VMEM


# ---------------------------------------------------------------------------
# Fast path: table resident in VMEM; TN-row chunks gathered via one-hot MXU.
# ---------------------------------------------------------------------------
def _onehot_gather_kernel(ids_ref, table_ref, out_ref):
    """ids_ref: (TN, 1) int32, table_ref: (Vp, Dp), out_ref: (TN, Dp)."""
    ids = ids_ref[...]                                     # (TN, 1)
    tn = ids.shape[0]
    vp = table_ref.shape[0]
    iota = lax.broadcasted_iota(jnp.int32, (tn, vp), 1)    # (TN, Vp)
    one_hot = (iota == ids).astype(table_ref.dtype)        # (TN, Vp)
    # HIGHEST precision => the f32 one-hot matmul reproduces the selected rows
    # exactly; bf16 tables hit the MXU's native path and are exact regardless.
    acc = jnp.dot(one_hot, table_ref[...],
                  preferred_element_type=jnp.float32,
                  precision=lax.Precision.HIGHEST)
    out_ref[...] = acc.astype(out_ref.dtype)


# ---------------------------------------------------------------------------
# Fallback (table too large for VMEM): batched per-row DMA gather from HBM.
# ---------------------------------------------------------------------------
def _dma_gather_kernel(ids_smem, table_hbm, out_ref, buf, sems, *, rows):
    """Gather `rows` table rows per grid step with overlapped row DMAs."""
    base = pl.program_id(0) * rows
    for r in range(rows):                                   # static unroll
        row = ids_smem[base + r]
        pltpu.make_async_copy(table_hbm.at[pl.ds(row, 1)],
                              buf.at[pl.ds(r, 1)],
                              sems.at[r]).start()
    for r in range(rows):
        pltpu.make_async_copy(table_hbm.at[pl.ds(0, 1)],    # shape-only for wait
                              buf.at[pl.ds(r, 1)],
                              sems.at[r]).wait()
    out_ref[...] = buf[...]


def _embedding_lookup(x, table_p, v, d, *, tn=512, force_fallback=False):
    """Core lookup on an already-padded (Vp, Dp) table. Returns x.shape+(d,)."""
    x = jnp.asarray(x)
    orig_shape = x.shape
    vp, dp = table_p.shape
    dtype = table_p.dtype
    itemsize = jnp.dtype(dtype).itemsize
    sub = _sublane(itemsize)

    ids = x.astype(jnp.int32).reshape(-1)
    # nn.Embedding raises on out-of-range ids; we clamp into [0, v-1] instead.
    ids = jnp.clip(ids, 0, v - 1)
    n = ids.shape[0]

    capacity = _vmem_capacity_bytes()
    usable = capacity - (8 << 20)                 # headroom for Mosaic scratch
    table_bytes = vp * dp * itemsize

    def working_set(tn_):
        return (2 * tn_ * dp * itemsize           # double-buffered out blocks
                + 2 * tn_ * 4                     # double-buffered id blocks
                + tn_ * vp * (4 + itemsize)       # iota + one-hot intermediates
                + tn_ * dp * 4                    # f32 matmul accumulator
                + (2 << 20))                      # misc slack

    # Largest chunk size (multiple of the sublane tile) that fits next to the
    # resident table; bigger TN amortizes per-step overhead and table reads.
    tn_eff = max(_round_up(min(tn, max(n, 1)), sub), sub)
    while tn_eff > sub and table_bytes + working_set(tn_eff) > usable:
        tn_eff = max(_round_up(tn_eff // 2, sub), sub)

    fast_ok = (table_bytes + working_set(tn_eff) <= usable) and not force_fallback

    if fast_ok:
        n_pad = _round_up(max(n, 1), tn_eff)
        ids_p = ids if n_pad == n else jnp.zeros((n_pad,), jnp.int32).at[:n].set(ids)
        ids_p = ids_p.reshape(n_pad, 1)
        num_chunks = n_pad // tn_eff
        vmem_limit = int(min(max(table_bytes + working_set(tn_eff), 16 << 20),
                             usable))
        # Only shard across TensorCores when there is real work to split: with
        # a tiny grid, "parallel" just duplicates the table DMA per core.
        dims = ("parallel",) if num_chunks > 2 else ("arbitrary",)

        out_flat = pl.pallas_call(
            _onehot_gather_kernel,
            out_shape=jax.ShapeDtypeStruct((n_pad, dp), dtype),
            grid_spec=pltpu.PrefetchScalarGridSpec(
                num_scalar_prefetch=0,
                grid=(num_chunks,),
                in_specs=[
                    pl.BlockSpec((tn_eff, 1), lambda i: (i, 0)),   # id chunk
                    # Whole table as a single un-pipelined VMEM-resident copy
                    # (no double-buffering of a grid-invariant block).
                    pl.BlockSpec(memory_space=pltpu.MemorySpace.VMEM),
                ],
                out_specs=pl.BlockSpec((tn_eff, dp), lambda i: (i, 0)),
            ),
            compiler_params=pltpu.CompilerParams(
                dimension_semantics=dims,
                vmem_limit_bytes=vmem_limit,
            ),
        )(ids_p, table_p)
        out = out_flat[:n, :d]
    else:
        # Batched-DMA fallback: table stays in HBM, `rows` rows per grid step.
        rows = 8
        n_pad = _round_up(max(n, 1), rows)
        ids_p = ids if n_pad == n else jnp.zeros((n_pad,), jnp.int32).at[:n].set(ids)
        num_chunks = n_pad // rows
        dims = ("parallel",) if num_chunks > 2 else ("arbitrary",)

        out_flat = pl.pallas_call(
            functools.partial(_dma_gather_kernel, rows=rows),
            out_shape=jax.ShapeDtypeStruct((n_pad, dp), dtype),
            grid_spec=pltpu.PrefetchScalarGridSpec(
                num_scalar_prefetch=1,                         # ids -> SMEM
                grid=(num_chunks,),
                in_specs=[pl.BlockSpec(memory_space=pl.ANY)],  # table in HBM
                out_specs=pl.BlockSpec((rows, dp), lambda i, ids_ref: (i, 0)),
                scratch_shapes=[pltpu.VMEM((rows, dp), dtype),
                                pltpu.SemaphoreType.DMA((rows,))],
            ),
            compiler_params=pltpu.CompilerParams(
                dimension_semantics=dims,
            ),
        )(ids_p, table_p)
        out = out_flat[:n, :d]

    return out.reshape(orig_shape + (d,))


class SpeakerEmbedding:
    """Pallas-TPU equivalent of the PyTorch Speaker_Embedding module.

    The embedding weight is padded to a TPU-friendly shape once at
    construction, so each forward pass only pays the in-kernel table DMA.
    """

    def __init__(self, weight, *, tn=512, force_fallback=False):
        weight = jnp.asarray(weight)
        self.num_embeddings, self.embedding_dim = weight.shape
        self.dtype = weight.dtype
        itemsize = jnp.dtype(self.dtype).itemsize
        sub = _sublane(itemsize)
        vp = _round_up(max(self.num_embeddings, sub), sub)
        dp = _round_up(self.embedding_dim, 128)
        if (vp, dp) != tuple(weight.shape):
            weight = (jnp.zeros((vp, dp), self.dtype)
                      .at[:self.num_embeddings, :self.embedding_dim]
                      .set(weight))
        self._table = weight
        self._tn = tn
        self._force_fallback = force_fallback   # test hook for the DMA path

    def __call__(self, x):
        return _embedding_lookup(
            x, self._table, self.num_embeddings, self.embedding_dim,
            tn=self._tn, force_fallback=self._force_fallback)


def make_speaker_embedding_params(key, speakers_number, speaker_embedding_dims,
                                  dtype=jnp.float32):
    """xavier_uniform_ init of the embedding weight (matches the PyTorch init).

    Perf tip: a bf16 table halves HBM/VMEM traffic and uses the MXU's native
    bf16 path; the one-hot gather stays exact.
    """
    bound = math.sqrt(6.0 / (speakers_number + speaker_embedding_dims))
    w = jax.random.uniform(
        key, (speakers_number, speaker_embedding_dims),
        minval=-bound, maxval=bound, dtype=jnp.float32)
    return w.astype(dtype)


if __name__ == "__main__":
    # Small hparams consistent with the module.
    speakers_number = 16
    speaker_embedding_dims = 128
    batch = 8

    key = jax.random.PRNGKey(0)
    k_w, k_x, k_w2, k_x2, k_x3 = jax.random.split(key, 5)

    # Case 1: f32 table, aligned dims (no padding copy at all), 1-D id batch.
    weight = make_speaker_embedding_params(k_w, speakers_number,
                                           speaker_embedding_dims)
    emb = SpeakerEmbedding(weight)
    x = jax.random.randint(k_x, (batch,), 0, speakers_number, dtype=jnp.int32)
    y = emb(x)
    jax.block_until_ready(y)
    assert y.shape == (batch, speaker_embedding_dims)
    assert y.dtype == weight.dtype
    assert bool(jnp.allclose(y, weight[x])), "fast path (f32) mismatch"

    # Case 2: bf16 table (recommended), unaligned dims (v=10, d=80), 2-D ids.
    w2 = make_speaker_embedding_params(k_w2, 10, 80, dtype=jnp.bfloat16)
    emb2 = SpeakerEmbedding(w2)
    x2 = jax.random.randint(k_x2, (2, 3), 0, 10, dtype=jnp.int32)
    y2 = emb2(x2)
    jax.block_until_ready(y2)
    assert y2.shape == (2, 3, 80)
    assert y2.dtype == jnp.bfloat16
    assert bool(jnp.allclose(y2, w2[x2])), "fast path (bf16/padded) mismatch"

    # Case 3: exercise the batched-DMA large-table fallback on a small table.
    emb3 = SpeakerEmbedding(weight, force_fallback=True)
    x3 = jax.random.randint(k_x3, (33,), 0, speakers_number, dtype=jnp.int32)
    y3 = emb3(x3)
    jax.block_until_ready(y3)
    assert y3.shape == (33, speaker_embedding_dims)
    assert bool(jnp.allclose(y3, weight[x3])), "DMA fallback mismatch"

    # TODO(synk): nn.Embedding raises on out-of-range ids; here ids are
    # clamped to [0, V-1] (semantic divergence, documented).
    print("KERNEL_OK")
</pallas_src>

<mosaic_0001>
module attributes {stable_mosaic.version = 11 : i64} {
  func.func @_onehot_gather_kernel(%arg0: i32, %arg1: memref<8x1xi32, #tpu.memory_space<vmem>>, %arg2: memref<16x128xf32, #tpu.memory_space<vmem>>, %arg3: memref<8x128xf32, #tpu.memory_space<vmem>>) attributes {dimension_semantics = [#tpu.dimension_semantics<arbitrary>], iteration_bounds = array<i64: 1>, scalar_prefetch = 0 : i64, scratch_operands = 0 : i64, tpu.core_type = #tpu.core_type<tc>, window_params = [{transform_indices = @transform_0, window_bounds = array<i64: 8, 1>}, {pipeline_mode = #tpu.pipeline_mode<synchronous>, transform_indices = @transform_1, window_bounds = array<i64: 16, 128>}, {transform_indices = @transform_2, window_bounds = array<i64: 8, 128>}]} {
    %c0 = arith.constant 0 : index
    %c0_0 = arith.constant 0 : index
    %0 = vector.load %arg1[%c0, %c0_0] : memref<8x1xi32, #tpu.memory_space<vmem>>, vector<8x1xi32>
    %1 = tpu.iota {dimensions = array<i32: 1>} : vector<8x16xi32>
    %2 = vector.broadcast %0 : vector<8x1xi32> to vector<8x16xi32>
    %3 = arith.cmpi eq, %1, %2 : vector<8x16xi32>
    %4 = arith.extui %3 : vector<8x16xi1> to vector<8x16xi32>
    %5 = arith.sitofp %4 : vector<8x16xi32> to vector<8x16xf32>
    %c0_1 = arith.constant 0 : index
    %c0_2 = arith.constant 0 : index
    %6 = vector.load %arg2[%c0_1, %c0_2] : memref<16x128xf32, #tpu.memory_space<vmem>>, vector<16x128xf32>
    %cst = arith.constant dense<0.000000e+00> : vector<8x128xf32>
    %7 = tpu.matmul %5, %6, %cst {dimension_numbers = #tpu.dot_dimension_numbers<[1], [0], [0], [1], [0, 0, 1, 1], [], []>, precision = #tpu.contract_precision<fp32>} : vector<8x16xf32>, vector<16x128xf32>, vector<8x128xf32> -> vector<8x128xf32>
    %c0_3 = arith.constant 0 : index
    %c0_4 = arith.constant 0 : index
    %8 = vector.load %arg3[%c0_3, %c0_4] : memref<8x128xf32, #tpu.memory_space<vmem>>, vector<8x128xf32>
    tpu.vector_store %arg3[%c0_3, %c0_4], %7 {strides = array<i32>} : memref<8x128xf32, #tpu.memory_space<vmem>>, vector<8x128xf32>,
    return
  }
  func.func @transform_0(%arg0: i32) -> (i32, i32) {
    %c0_i32 = arith.constant 0 : i32
    %c0_i32_0 = arith.constant 0 : i32
    return %arg0, %c0_i32 : i32, i32
  }
  func.func @transform_1(%arg0: i32) -> (i32, i32) {
    %c0_i32 = arith.constant 0 : i32
    %c0_i32_0 = arith.constant 0 : i32
    %c0_i32_1 = arith.constant 0 : i32
    return %c0_i32, %c0_i32_0 : i32, i32
  }
  func.func @transform_2(%arg0: i32) -> (i32, i32) {
    %c0_i32 = arith.constant 0 : i32
    %c0_i32_0 = arith.constant 0 : i32
    return %arg0, %c0_i32 : i32, i32
  }
}

</mosaic_0001>

<llo_original>
// kernel: tpu_custom_call.1
$region0: #{tpu_custom_call.1}
  #allocation0 [shape = 'u32[]', space=smem, size = 0x4, offset = 0x4, fixed_abs, tag = 'smem constant byte address 0x4 - core index']
  #allocation1 [shape = 'u32[144,128]{1,0:T(1,128)}', space=vmem, size = 0x12000, scoped, tag = 'internal scratch']
  %s0 = inlined_call_operand.vmem [shape: s32[8,1], index: 0, kind: input, shape index: {}]
  %s1 = inlined_call_operand.hbm [shape: f32[16,128], index: 1, kind: input, shape index: {}]
  %s2 = inlined_call_operand.hbm [shape: f32[8,128], index: 2, kind: output, shape index: {}]
  %s3 = sld [smem:[#allocation0]]
  $region22: #{tpu_custom_call.1} parent=0
    _
  %s5 = ssub.s32 1, %s3
  %s6 = scalar_select 0, %s5, %s3
  $region1: #{tpu_custom_call.1} parent=0
    #allocation2 [shape = 'u8[8192]{0}', space=vmem, size = 0x2000, scoped, tag = 'input window, operand 1, single buffered']
    #allocation3 [shape = 's32[1]{0}', space=sflag, size = 0x4, scoped, tag = 'scoped memory for tpu_custom_call.1']
    #allocation4 [shape = 's32[1]{0}', space=sflag, size = 0x4, scoped, tag = 'scoped memory for tpu_custom_call.1']
    #allocation5 [shape = 'u8[4096]{0}', space=vmem, size = 0x1000, scoped, tag = 'output window, operand 0, single buffered']
    %7 = vsyncpa [#allocation3], 0
    %8 = vsyncpa [#allocation4], 0
    // Predicated region
    $region2: #{tpu_custom_call.1} parent=1 // pred_check
      _
    $region3: #{tpu_custom_call.1} parent=1 // pred_check_branch
      %10 = sbr.rel (0) target = $region5
    $region4: #{tpu_custom_call.1} parent=1 // pred_region
      _
    $region5: #{tpu_custom_call.1} parent=1 // pred_fallthru
      _
    // Predicated region
    $region6: #{tpu_custom_call.1} parent=1 // pred_check
      _
    $region7: #{tpu_custom_call.1} parent=1 // pred_check_branch
      %12 = sbr.rel (0) target = $region9
    $region8: #{tpu_custom_call.1} parent=1 // pred_region
      %s14 = ssub.s32 256, 256
      %15 = vsyncadd [#allocation3], %s14
      %s16 = sshll.u32 [#allocation2], 4
      %s17 = int_to_ptr.vmem [resolvable:$true] %s16
      %22 = dma.hbm_to_vmem [thread:$0]  %s1, 256, %s17, [#allocation3], 128, 128, 8
    $region9: #{tpu_custom_call.1} parent=1 // pred_fallthru
      _
    // Predicated region
    $region10: #{tpu_custom_call.1} parent=1 // pred_check
      _
    $region11: #{tpu_custom_call.1} parent=1 // pred_check_branch
      %24 = sbr.rel (0) target = $region13
    $region12: #{tpu_custom_call.1} parent=1 // pred_region
      %25 = dma.done [#allocation3], 256
    $region13: #{tpu_custom_call.1} parent=1 // pred_fallthru
      _
    %v26 = vld [vmem:[%s0] sm:$0xff]
    %v27 = vlaneseq
    %v28 = vand.u32 %v27, 127
    %29 = vset.pattern.permute.xlu0 0
    %30 = vperm.xlu0 %29, %v26
    %v31 = vpop.permute.xlu0 %30
    %vm32 = vcmp.eq.s32.totalorder %v28, %v31
    %v33 = vsel %vm32, 1, 0
    %v34 = vcvt.s32.f32 %v33
    %v35 = vld [vmem:[#allocation2] sm:$0xff]
    %v36 = vld [vmem:[#allocation2 + $0x8] sm:$0xff]
    %vm37 = vcmask 130048
    %v39 = vsel %vm37, %v34, 0
    %41 = vmatprep.subr.mxu0 0.0
    %v42 = vand.u32 %v35, 4294901760
    %43 = vmatpush1.msra.mxu0 %v42
    %44 = vmatprep.subr.mxu0 0.0
    %v45 = vand.u32 %v36, 4294901760
    %46 = vmatpush1.msra.mxu0 %v45
    %47 = vmatprep.subr.mxu0 0.0
    %48 = vmatpush1.msra.mxu0 0.0
    %49 = vmatprep.subr.mxu0 0.0
    %50 = vmatpush1.msra.mxu0 0.0
    %51 = vmatprep.subr.mxu0 0.0
    %52 = vmatpush1.msra.mxu0 0.0
    %53 = vmatprep.subr.mxu0 0.0
    %54 = vmatpush1.msra.mxu0 0.0
    %55 = vmatprep.subr.mxu0 0.0
    %56 = vmatpush1.msra.mxu0 0.0
    %57 = vmatprep.subr.mxu0 0.0
    %58 = vmatpush1.msra.mxu0 0.0
    %59 = vmatprep.subr.mxu0 0.0
    %60 = vmatpush1.msra.mxu0 0.0
    %61 = vmatprep.subr.mxu0 0.0
    %62 = vmatpush1.msra.mxu0 0.0
    %63 = vmatprep.subr.mxu0 0.0
    %64 = vmatpush1.msra.mxu0 0.0
    %65 = vmatprep.subr.mxu0 0.0
    %66 = vmatpush1.msra.mxu0 0.0
    %67 = vmatprep.subr.mxu0 0.0
    %68 = vmatpush1.msra.mxu0 0.0
    %69 = vmatprep.subr.mxu0 0.0
    %70 = vmatpush1.msra.mxu0 0.0
    %71 = vmatprep.subr.mxu0 0.0
    %72 = vmatpush1.msra.mxu0 0.0
    %73 = vmatprep.subr.mxu0 0.0
    %74 = vmatpush1.msra.mxu0 0.0
    %75 = vmatprep.subr.mxu0 0.0
    %76 = vmatpush1.msra.mxu0 0.0
    %77 = vmatprep.subr.mxu0 0.0
    %78 = vmatpush1.msra.mxu0 0.0
    %79 = vmatprep.subr.mxu0 0.0
    %80 = vmatpush1.msra.mxu0 0.0
    %81 = vmatprep.subr.mxu0 0.0
    %82 = vmatpush1.msra.mxu0 0.0
    %83 = vmatprep.subr.mxu0 0.0
    %84 = vmatpush1.msra.mxu0 0.0
    %85 = vmatprep.subr.mxu0 0.0
    %86 = vmatpush1.msra.mxu0 0.0
    %87 = vmatprep.subr.mxu0 0.0
    %88 = vmatpush1.msra.mxu0 0.0
    %89 = vmatprep.subr.mxu0 0.0
    %90 = vmatpush1.msra.mxu0 0.0
    %91 = vmatprep.subr.mxu0 0.0
    %92 = vmatpush1.msra.mxu0 0.0
    %93 = vmatprep.subr.mxu0 0.0
    %94 = vmatpush1.msra.mxu0 0.0
    %95 = vmatprep.subr.mxu0 0.0
    %96 = vmatpush1.msra.mxu0 0.0
    %97 = vmatprep.subr.mxu0 0.0
    %98 = vmatpush1.msra.mxu0 0.0
    %99 = vmatprep.subr.mxu0 0.0
    %100 = vmatpush1.msra.mxu0 0.0
    %101 = vmatprep.subr.mxu0 0.0
    %102 = vmatpush1.msra.mxu0 0.0
    %103 = vmatprep.subr.mxu0 0.0
    %104 = vmatpush1.msra.mxu0 0.0
    %105 = vmatprep.subr.mxu0 0.0
    %106 = vmatpush1.msra.mxu0 0.0
    %107 = vmatprep.mubr.f32.mxu0 0.0
    %v108 = vand.u32 %v39, 4294901760
    %v109 = vsub.f32 %v39, %v108
    %v110 = vand.u32 %v109, 4294901760
    %v111 = vsub.f32 %v109, %v110
    %v112 = vand.u32 %v111, 4294901760
    %113 = vmatmul.mubr.f32.gmra.mrb[0].mxu0 %v112
    %v114 = vpop.f32.mrb[0].mxu0
    %v115 = vadd.f32 0.0, %v114
    %v116 = vpop.f32.mrb[0].mxu0
    %117 = vdwg.mxu0
    %118 = vmatprep.subr.mxu0 0.0
    %v119 = vand.u32 %v35, 4294901760
    %v120 = vsub.f32 %v35, %v119
    %v121 = vand.u32 %v120, 4294901760
    %v122 = vsub.f32 %v120, %v121
    %v123 = vand.u32 %v122, 4294901760
    %124 = vmatpush1.msra.mxu0 %v123
    %125 = vmatprep.subr.mxu0 0.0
    %v126 = vand.u32 %v36, 4294901760
    %v127 = vsub.f32 %v36, %v126
    %v128 = vand.u32 %v127, 4294901760
    %v129 = vsub.f32 %v127, %v128
    %v130 = vand.u32 %v129, 4294901760
    %131 = vmatpush1.msra.mxu0 %v130
    %132 = vmatprep.subr.mxu0 0.0
    %133 = vmatpush1.msra.mxu0 0.0
    %134 = vmatprep.subr.mxu0 0.0
    %135 = vmatpush1.msra.mxu0 0.0
    %136 = vmatprep.subr.mxu0 0.0
    %137 = vmatpush1.msra.mxu0 0.0
    %138 = vmatprep.subr.mxu0 0.0
    %139 = vmatpush1.msra.mxu0 0.0
    %140 = vmatprep.subr.mxu0 0.0
    %141 = vmatpush1.msra.mxu0 0.0
    %142 = vmatprep.subr.mxu0 0.0
    %143 = vmatpush1.msra.mxu0 0.0
    %144 = vmatprep.subr.mxu0 0.0
    %145 = vmatpush1.msra.mxu0 0.0
    %146 = vmatprep.subr.mxu0 0.0
    %147 = vmatpush1.msra.mxu0 0.0
    %148 = vmatprep.subr.mxu0 0.0
    %149 = vmatpush1.msra.mxu0 0.0
    %150 = vmatprep.subr.mxu0 0.0
    %151 = vmatpush1.msra.mxu0 0.0
    %152 = vmatprep.subr.mxu0 0.0
    %153 = vmatpush1.msra.mxu0 0.0
    %154 = vmatprep.subr.mxu0 0.0
    %155 = vmatpush1.msra.mxu0 0.0
    %156 = vmatprep.subr.mxu0 0.0
    %157 = vmatpush1.msra.mxu0 0.0
    %158 = vmatprep.subr.mxu0 0.0
    %159 = vmatpush1.msra.mxu0 0.0
    %160 = vmatprep.subr.mxu0 0.0
    %161 = vmatpush1.msra.mxu0 0.0
    %162 = vmatprep.subr.mxu0 0.0
    %163 = vmatpush1.msra.mxu0 0.0
    %164 = vmatprep.subr.mxu0 0.0
    %165 = vmatpush1.msra.mxu0 0.0
    %166 = vmatprep.subr.mxu0 0.0
    %167 = vmatpush1.msra.mxu0 0.0
    %168 = vmatprep.subr.mxu0 0.0
    %169 = vmatpush1.msra.mxu0 0.0
    %170 = vmatprep.subr.mxu0 0.0
    %171 = vmatpush1.msra.mxu0 0.0
    %172 = vmatprep.subr.mxu0 0.0
    %173 = vmatpush1.msra.mxu0 0.0
    %174 = vmatprep.subr.mxu0 0.0
    %175 = vmatpush1.msra.mxu0 0.0
    %176 = vmatprep.subr.mxu0 0.0
    %177 = vmatpush1.msra.mxu0 0.0
    %178 = vmatprep.subr.mxu0 0.0
    %179 = vmatpush1.msra.mxu0 0.0
    %180 = vmatprep.subr.mxu0 0.0
    %181 = vmatpush1.msra.mxu0 0.0
    %182 = vmatprep.subr.mxu0 0.0
    %183 = vmatpush1.msra.mxu0 0.0
    %184 = vmatprep.subr.mxu0 0.0
    %185 = vmatpush1.msra.mxu0 0.0
    %186 = vmatprep.subr.mxu0 0.0
    %187 = vmatpush1.msra.mxu0 0.0
    %188 = vmatprep.subr.mxu0 0.0
    %189 = vmatpush1.msra.mxu0 0.0
    %190 = vmatprep.subr.mxu0 0.0
    %191 = vmatpush1.msra.mxu0 0.0
    %192 = vmatprep.mubr.f32.mxu0 0.0
    %v193 = vand.u32 %v39, 4294901760
    %194 = vmatmul.mubr.f32.gmra.mrb[0].mxu0 %v193
    %v195 = vpop.f32.mrb[0].mxu0
    %v196 = vadd.f32 %v115, %v195
    %v197 = vpop.f32.mrb[0].mxu0
    %198 = vdwg.mxu0
    %199 = vmatprep.subr.mxu0 0.0
    %v200 = vand.u32 %v35, 4294901760
    %v201 = vsub.f32 %v35, %v200
    %202 = vmatpush1.msra.mxu0 %v201
    %203 = vmatprep.subr.mxu0 0.0
    %v204 = vand.u32 %v36, 4294901760
    %v205 = vsub.f32 %v36, %v204
    %206 = vmatpush1.msra.mxu0 %v205
    %207 = vmatprep.subr.mxu0 0.0
    %208 = vmatpush1.msra.mxu0 0.0
    %209 = vmatprep.subr.mxu0 0.0
    %210 = vmatpush1.msra.mxu0 0.0
    %211 = vmatprep.subr.mxu0 0.0
    %212 = vmatpush1.msra.mxu0 0.0
    %213 = vmatprep.subr.mxu0 0.0
    %214 = vmatpush1.msra.mxu0 0.0
    %215 = vmatprep.subr.mxu0 0.0
    %216 = vmatpush1.msra.mxu0 0.0
    %217 = vmatprep.subr.mxu0 0.0
    %218 = vmatpush1.msra.mxu0 0.0
    %219 = vmatprep.subr.mxu0 0.0
    %220 = vmatpush1.msra.mxu0 0.0
    %221 = vmatprep.subr.mxu0 0.0
    %222 = vmatpush1.msra.mxu0 0.0
    %223 = vmatprep.subr.mxu0 0.0
    %224 = vmatpush1.msra.mxu0 0.0
    %225 = vmatprep.subr.mxu0 0.0
    %226 = vmatpush1.msra.mxu0 0.0
    %227 = vmatprep.subr.mxu0 0.0
    %228 = vmatpush1.msra.mxu0 0.0
    %229 = vmatprep.subr.mxu0 0.0
    %230 = vmatpush1.msra.mxu0 0.0
    %231 = vmatprep.subr.mxu0 0.0
    %232 = vmatpush1.msra.mxu0 0.0
    %233 = vmatprep.subr.mxu0 0.0
    %234 = vmatpush1.msra.mxu0 0.0
    %235 = vmatprep.subr.mxu0 0.0
    %236 = vmatpush1.msra.mxu0 0.0
    %237 = vmatprep.subr.mxu0 0.0
    %238 = vmatpush1.msra.mxu0 0.0
    %239 = vmatprep.subr.mxu0 0.0
    %240 = vmatpush1.msra.mxu0 0.0
    %241 = vmatprep.subr.mxu0 0.0
    %242 = vmatpush1.msra.mxu0 0.0
    %243 = vmatprep.subr.mxu0 0.0
    %244 = vmatpush1.msra.mxu0 0.0
    %245 = vmatprep.subr.mxu0 0.0
    %246 = vmatpush1.msra.mxu0 0.0
    %247 = vmatprep.subr.mxu0 0.0
    %248 = vmatpush1.msra.mxu0 0.0
    %249 = vmatprep.subr.mxu0 0.0
    %250 = vmatpush1.msra.mxu0 0.0
    %251 = vmatprep.subr.mxu0 0.0
    %252 = vmatpush1.msra.mxu0 0.0
    %253 = vmatprep.subr.mxu0 0.0
    %254 = vmatpush1.msra.mxu0 0.0
    %255 = vmatprep.subr.mxu0 0.0
    %256 = vmatpush1.msra.mxu0 0.0
    %257 = vmatprep.subr.mxu0 0.0
    %258 = vmatpush1.msra.mxu0 0.0
    %259 = vmatprep.subr.mxu0 0.0
    %260 = vmatpush1.msra.mxu0 0.0
    %261 = vmatprep.subr.mxu0 0.0
    %262 = vmatpush1.msra.mxu0 0.0
    %263 = vmatprep.subr.mxu0 0.0
    %264 = vmatpush1.msra.mxu0 0.0
    %265 = vmatprep.subr.mxu0 0.0
    %266 = vmatpush1.msra.mxu0 0.0
    %267 = vmatprep.mubr.f32.mxu0 0.0
    %v268 = vand.u32 %v39, 4294901760
    %v269 = vsub.f32 %v39, %v268
    %270 = vmatmul.mubr.f32.gmra.mrb[0].mxu0 %v269
    %v271 = vpop.f32.mrb[0].mxu0
    %v272 = vadd.f32 %v196, %v271
    %v273 = vpop.f32.mrb[0].mxu0
    %274 = vdwg.mxu0
    %275 = vmatprep.subr.mxu0 0.0
    %v276 = vand.u32 %v35, 4294901760
    %277 = vmatpush1.msra.mxu0 %v276
    %278 = vmatprep.subr.mxu0 0.0
    %v279 = vand.u32 %v36, 4294901760
    %280 = vmatpush1.msra.mxu0 %v279
    %281 = vmatprep.subr.mxu0 0.0
    %282 = vmatpush1.msra.mxu0 0.0
    %283 = vmatprep.subr.mxu0 0.0
    %284 = vmatpush1.msra.mxu0 0.0
    %285 = vmatprep.subr.mxu0 0.0
    %286 = vmatpush1.msra.mxu0 0.0
    %287 = vmatprep.subr.mxu0 0.0
    %288 = vmatpush1.msra.mxu0 0.0
    %289 = vmatprep.subr.mxu0 0.0
    %290 = vmatpush1.msra.mxu0 0.0
    %291 = vmatprep.subr.mxu0 0.0
    %292 = vmatpush1.msra.mxu0 0.0
    %293 = vmatprep.subr.mxu0 0.0
    %294 = vmatpush1.msra.mxu0 0.0
    %295 = vmatprep.subr.mxu0 0.0
    %296 = vmatpush1.msra.mxu0 0.0
    %297 = vmatprep.subr.mxu0 0.0
    %298 = vmatpush1.msra.mxu0 0.0
    %299 = vmatprep.subr.mxu0 0.0
    %300 = vmatpush1.msra.mxu0 0.0
    %301 = vmatprep.subr.mxu0 0.0
    %302 = vmatpush1.msra.mxu0 0.0
    %303 = vmatprep.subr.mxu0 0.0
    %304 = vmatpush1.msra.mxu0 0.0
    %305 = vmatprep.subr.mxu0 0.0
    %306 = vmatpush1.msra.mxu0 0.0
    %307 = vmatprep.subr.mxu0 0.0
    %308 = vmatpush1.msra.mxu0 0.0
    %309 = vmatprep.subr.mxu0 0.0
    %310 = vmatpush1.msra.mxu0 0.0
    %311 = vmatprep.subr.mxu0 0.0
    %312 = vmatpush1.msra.mxu0 0.0
    %313 = vmatprep.subr.mxu0 0.0
    %314 = vmatpush1.msra.mxu0 0.0
    %315 = vmatprep.subr.mxu0 0.0
    %316 = vmatpush1.msra.mxu0 0.0
    %317 = vmatprep.subr.mxu0 0.0
    %318 = vmatpush1.msra.mxu0 0.0
    %319 = vmatprep.subr.mxu0 0.0
    %320 = vmatpush1.msra.mxu0 0.0
    %321 = vmatprep.subr.mxu0 0.0
    %322 = vmatpush1.msra.mxu0 0.0
    %323 = vmatprep.subr.mxu0 0.0
    %324 = vmatpush1.msra.mxu0 0.0
    %325 = vmatprep.subr.mxu0 0.0
    %326 = vmatpush1.msra.mxu0 0.0
    %327 = vmatprep.subr.mxu0 0.0
    %328 = vmatpush1.msra.mxu0 0.0
    %329 = vmatprep.subr.mxu0 0.0
    %330 = vmatpush1.msra.mxu0 0.0
    %331 = vmatprep.subr.mxu0 0.0
    %332 = vmatpush1.msra.mxu0 0.0
    %333 = vmatprep.subr.mxu0 0.0
    %334 = vmatpush1.msra.mxu0 0.0
    %335 = vmatprep.subr.mxu0 0.0
    %336 = vmatpush1.msra.mxu0 0.0
    %337 = vmatprep.subr.mxu0 0.0
    %338 = vmatpush1.msra.mxu0 0.0
    %339 = vmatprep.subr.mxu0 0.0
    %340 = vmatpush1.msra.mxu0 0.0
    %341 = vmatprep.mubr.f32.mxu0 0.0
    %v342 = vand.u32 %v39, 4294901760
    %v343 = vsub.f32 %v39, %v342
    %v344 = vand.u32 %v343, 4294901760
    %345 = vmatmul.mubr.f32.gmra.mrb[0].mxu0 %v344
    %v346 = vpop.f32.mrb[0].mxu0
    %v347 = vadd.f32 %v272, %v346
    %v348 = vpop.f32.mrb[0].mxu0
    %349 = vdwg.mxu0
    %350 = vmatprep.subr.mxu0 0.0
    %v351 = vand.u32 %v35, 4294901760
    %v352 = vsub.f32 %v35, %v351
    %v353 = vand.u32 %v352, 4294901760
    %354 = vmatpush1.msra.mxu0 %v353
    %355 = vmatprep.subr.mxu0 0.0
    %v356 = vand.u32 %v36, 4294901760
    %v357 = vsub.f32 %v36, %v356
    %v358 = vand.u32 %v357, 4294901760
    %359 = vmatpush1.msra.mxu0 %v358
    %360 = vmatprep.subr.mxu0 0.0
    %361 = vmatpush1.msra.mxu0 0.0
    %362 = vmatprep.subr.mxu0 0.0
    %363 = vmatpush1.msra.mxu0 0.0
    %364 = vmatprep.subr.mxu0 0.0
    %365 = vmatpush1.msra.mxu0 0.0
    %366 = vmatprep.subr.mxu0 0.0
    %367 = vmatpush1.msra.mxu0 0.0
    %368 = vmatprep.subr.mxu0 0.0
    %369 = vmatpush1.msra.mxu0 0.0
    %370 = vmatprep.subr.mxu0 0.0
    %371 = vmatpush1.msra.mxu0 0.0
    %372 = vmatprep.subr.mxu0 0.0
    %373 = vmatpush1.msra.mxu0 0.0
    %374 = vmatprep.subr.mxu0 0.0
    %375 = vmatpush1.msra.mxu0 0.0
    %376 = vmatprep.subr.mxu0 0.0
    %377 = vmatpush1.msra.mxu0 0.0
    %378 = vmatprep.subr.mxu0 0.0
    %379 = vmatpush1.msra.mxu0 0.0
    %380 = vmatprep.subr.mxu0 0.0
    %381 = vmatpush1.msra.mxu0 0.0
    %382 = vmatprep.subr.mxu0 0.0
    %383 = vmatpush1.msra.mxu0 0.0
    %384 = vmatprep.subr.mxu0 0.0
    %385 = vmatpush1.msra.mxu0 0.0
    %386 = vmatprep.subr.mxu0 0.0
    %387 = vmatpush1.msra.mxu0 0.0
    %388 = vmatprep.subr.mxu0 0.0
    %389 = vmatpush1.msra.mxu0 0.0
    %390 = vmatprep.subr.mxu0 0.0
    %391 = vmatpush1.msra.mxu0 0.0
    %392 = vmatprep.subr.mxu0 0.0
    %393 = vmatpush1.msra.mxu0 0.0
    %394 = vmatprep.subr.mxu0 0.0
    %395 = vmatpush1.msra.mxu0 0.0
    %396 = vmatprep.subr.mxu0 0.0
    %397 = vmatpush1.msra.mxu0 0.0
    %398 = vmatprep.subr.mxu0 0.0
    %399 = vmatpush1.msra.mxu0 0.0
    %400 = vmatprep.subr.mxu0 0.0
    %401 = vmatpush1.msra.mxu0 0.0
    %402 = vmatprep.subr.mxu0 0.0
    %403 = vmatpush1.msra.mxu0 0.0
    %404 = vmatprep.subr.mxu0 0.0
    %405 = vmatpush1.msra.mxu0 0.0
    %406 = vmatprep.subr.mxu0 0.0
    %407 = vmatpush1.msra.mxu0 0.0
    %408 = vmatprep.subr.mxu0 0.0
    %409 = vmatpush1.msra.mxu0 0.0
    %410 = vmatprep.subr.mxu0 0.0
    %411 = vmatpush1.msra.mxu0 0.0
    %412 = vmatprep.subr.mxu0 0.0
    %413 = vmatpush1.msra.mxu0 0.0
    %414 = vmatprep.subr.mxu0 0.0
    %415 = vmatpush1.msra.mxu0 0.0
    %416 = vmatprep.subr.mxu0 0.0
    %417 = vmatpush1.msra.mxu0 0.0
    %418 = vmatprep.subr.mxu0 0.0
    %419 = vmatpush1.msra.mxu0 0.0
    %420 = vmatprep.mubr.f32.mxu0 0.0
    %v421 = vand.u32 %v39, 4294901760
    %422 = vmatmul.mubr.f32.gmra.mrb[0].mxu0 %v421
    %v423 = vpop.f32.mrb[0].mxu0
    %v424 = vadd.f32 %v347, %v423
    %v425 = vpop.f32.mrb[0].mxu0
    %426 = vdwg.mxu0
    %427 = vmatprep.subr.mxu0 0.0
    %v428 = vand.u32 %v35, 4294901760
    %429 = vmatpush1.msra.mxu0 %v428
    %430 = vmatprep.subr.mxu0 0.0
    %v431 = vand.u32 %v36, 4294901760
    %432 = vmatpush1.msra.mxu0 %v431
    %433 = vmatprep.subr.mxu0 0.0
    %434 = vmatpush1.msra.mxu0 0.0
    %435 = vmatprep.subr.mxu0 0.0
    %436 = vmatpush1.msra.mxu0 0.0
    %437 = vmatprep.subr.mxu0 0.0
    %438 = vmatpush1.msra.mxu0 0.0
    %439 = vmatprep.subr.mxu0 0.0
    %440 = vmatpush1.msra.mxu0 0.0
    %441 = vmatprep.subr.mxu0 0.0
    %442 = vmatpush1.msra.mxu0 0.0
    %443 = vmatprep.subr.mxu0 0.0
    %444 = vmatpush1.msra.mxu0 0.0
    %445 = vmatprep.subr.mxu0 0.0
    %446 = vmatpush1.msra.mxu0 0.0
    %447 = vmatprep.subr.mxu0 0.0
    %448 = vmatpush1.msra.mxu0 0.0
    %449 = vmatprep.subr.mxu0 0.0
    %450 = vmatpush1.msra.mxu0 0.0
    %451 = vmatprep.subr.mxu0 0.0
    %452 = vmatpush1.msra.mxu0 0.0
    %453 = vmatprep.subr.mxu0 0.0
    %454 = vmatpush1.msra.mxu0 0.0
    %455 = vmatprep.subr.mxu0 0.0
    %456 = vmatpush1.msra.mxu0 0.0
    %457 = vmatprep.subr.mxu0 0.0
    %458 = vmatpush1.msra.mxu0 0.0
    %459 = vmatprep.subr.mxu0 0.0
    %460 = vmatpush1.msra.mxu0 0.0
    %461 = vmatprep.subr.mxu0 0.0
    %462 = vmatpush1.msra.mxu0 0.0
    %463 = vmatprep.subr.mxu0 0.0
    %464 = vmatpush1.msra.mxu0 0.0
    %465 = vmatprep.subr.mxu0 0.0
    %466 = vmatpush1.msra.mxu0 0.0
    %467 = vmatprep.subr.mxu0 0.0
    %468 = vmatpush1.msra.mxu0 0.0
    %469 = vmatprep.subr.mxu0 0.0
    %470 = vmatpush1.msra.mxu0 0.0
    %471 = vmatprep.subr.mxu0 0.0
    %472 = vmatpush1.msra.mxu0 0.0
    %473 = vmatprep.subr.mxu0 0.0
    %474 = vmatpush1.msra.mxu0 0.0
    %475 = vmatprep.subr.mxu0 0.0
    %476 = vmatpush1.msra.mxu0 0.0
    %477 = vmatprep.subr.mxu0 0.0
    %478 = vmatpush1.msra.mxu0 0.0
    %479 = vmatprep.subr.mxu0 0.0
    %480 = vmatpush1.msra.mxu0 0.0
    %481 = vmatprep.subr.mxu0 0.0
    %482 = vmatpush1.msra.mxu0 0.0
    %483 = vmatprep.subr.mxu0 0.0
    %484 = vmatpush1.msra.mxu0 0.0
    %485 = vmatprep.subr.mxu0 0.0
    %486 = vmatpush1.msra.mxu0 0.0
    %487 = vmatprep.subr.mxu0 0.0
    %488 = vmatpush1.msra.mxu0 0.0
    %489 = vmatprep.subr.mxu0 0.0
    %490 = vmatpush1.msra.mxu0 0.0
    %491 = vmatprep.subr.mxu0 0.0
    %492 = vmatpush1.msra.mxu0 0.0
    %493 = vmatprep.mubr.f32.mxu0 0.0
    %v494 = vand.u32 %v39, 4294901760
    %495 = vmatmul.mubr.f32.gmra.mrb[0].mxu0 %v494
    %v496 = vpop.f32.mrb[0].mxu0
    %v497 = vadd.f32 %v424, %v496
    %v498 = vpop.f32.mrb[0].mxu0
    %499 = vdwg.mxu0
    %500 = vst [vmem:[#allocation5] sm:$0xff] %v497
    // Predicated region
    $region14: #{tpu_custom_call.1} parent=1 // pred_check
      _
    $region15: #{tpu_custom_call.1} parent=1 // pred_check_branch
      %502 = sbr.rel (0) target = $region17
    $region16: #{tpu_custom_call.1} parent=1 // pred_region
      %s504 = ssub.s32 128, 128
      %505 = vsyncadd [#allocation4], %s504
      %s507 = sshll.u32 [#allocation5], 4
      %s508 = int_to_ptr.vmem [resolvable:$true] %s507
      %510 = dma.vmem_to_hbm [thread:$0]  %s508, 128, %s2, [#allocation4]
    $region17: #{tpu_custom_call.1} parent=1 // pred_fallthru
      _
    // Predicated region
    $region18: #{tpu_custom_call.1} parent=1 // pred_check
      _
    $region19: #{tpu_custom_call.1} parent=1 // pred_check_branch
      %512 = sbr.rel (0) target = $region21
    $region20: #{tpu_custom_call.1} parent=1 // pred_region
      %513 = dma.done [#allocation4], 128
    $region21: #{tpu_custom_call.1} parent=1 // pred_fallthru
      _
    %514 = vsyncpa [#allocation3], 1
    %515 = vsyncpa [#allocation4], 1

</llo_original>
